<compile_context>
chip_gen: v7x
topology: tpu7x:2x2x1
jax: 0.10.0
libtpu: 0.0.40
codegen_flags: <defaults>
</compile_context>

<pallas_src>
import jax
import jax.numpy as jnp
from jax import lax
from jax.experimental import pallas as pl
from jax.experimental.pallas import tpu as pltpu


# ---------------------------------------------------------------------------
# Helpers
# ---------------------------------------------------------------------------
def _pick_tile(total, cap, align):
    """Largest tile <= cap that divides `total` and is `align`-aligned.

    Falls back to the full dimension (untiled but always correct) when no
    aligned divisor exists, which also satisfies the (8, 128) block rule.
    """
    if total <= cap:
        return total
    for t in range(cap, 0, -1):
        if total % t == 0 and t % align == 0:
            return t
    return total


def _vmem_limit_bytes():
    """Per-generation scoped-VMEM budget: generous on v5e/v6e (128 MiB),
    conservative on v7x (64 MiB)."""
    try:
        cap = int(pltpu.get_tpu_info().vmem_capacity_bytes)
    except Exception:
        cap = 64 * 1024 * 1024
    return min(int(cap * 0.6), 100 * 1024 * 1024)


# ---------------------------------------------------------------------------
# Kernel 1: fused QKV projection  qkv = x @ [Wq*scale | Wk | Wv]
#           K-tiled with an f32 accumulator; writes q/k/v head-major.
# ---------------------------------------------------------------------------
def qkv_proj_kernel(x_ref, w_ref, q_ref, k_ref, v_ref, acc_ref):
    kk = pl.program_id(2)

    @pl.when(kk == 0)
    def _init():
        acc_ref[...] = jnp.zeros(acc_ref.shape, acc_ref.dtype)

    acc_ref[...] += jnp.dot(x_ref[0], w_ref[...],
                            preferred_element_type=jnp.float32)

    @pl.when(kk == pl.num_programs(2) - 1)
    def _finalize():
        acc = acc_ref[...]                      # (tr, 3*d_out) f32
        num_heads = q_ref.shape[1]
        head_dim = q_ref.shape[3]
        d_out = num_heads * head_dim
        # Head-major split via static lane slices: no in-kernel transpose and
        # no HBM round-trip transpose between the two pallas_calls.
        for h in range(num_heads):
            lo = h * head_dim
            q_ref[0, h] = acc[:, lo:lo + head_dim].astype(q_ref.dtype)
            k_ref[0, h] = acc[:, d_out + lo:d_out + lo + head_dim].astype(k_ref.dtype)
            v_ref[0, h] = acc[:, 2 * d_out + lo:2 * d_out + lo + head_dim].astype(v_ref.dtype)


# ---------------------------------------------------------------------------
# Kernel 2: flash-style causal attention (all heads batched in-kernel)
#           + fused single-contraction output projection.
# ---------------------------------------------------------------------------
def flash_attn_kernel(q_ref, k_ref, v_ref, wo_ref, bo_ref, o_ref,
                      m_sc, l_sc, acc_sc, ctx_sc):
    qi = pl.program_id(1)
    ki = pl.program_id(2)

    @pl.when(ki == 0)
    def _init():
        m_sc[...] = jnp.full(m_sc.shape, -jnp.inf, m_sc.dtype)
        l_sc[...] = jnp.zeros(l_sc.shape, l_sc.dtype)
        acc_sc[...] = jnp.zeros(acc_sc.shape, acc_sc.dtype)

    def _scores():
        # One batched MXU contraction over all heads; the 1/sqrt(head_dim)
        # softmax scale is folded into W_query. f32 accumulation.
        return jnp.einsum("hqd,hkd->hqk", q_ref[0], k_ref[0],
                          preferred_element_type=jnp.float32)

    def _online_update(s):
        v = v_ref[0]
        m_prev = m_sc[...]
        m_new = jnp.maximum(m_prev, jnp.max(s, axis=-1, keepdims=True))
        alpha = jnp.exp(m_prev - m_new)
        p = jnp.exp(s - m_new)
        l_sc[...] = alpha * l_sc[...] + jnp.sum(p, axis=-1, keepdims=True)
        # Deferred normalization: accumulate the un-normalized PV product.
        acc_sc[...] = alpha * acc_sc[...] + jnp.einsum(
            "hqk,hkd->hqd", p.astype(v.dtype), v,
            preferred_element_type=jnp.float32)
        m_sc[...] = m_new

    # Causal block skipping (tq == tkv): ki > qi tiles contribute nothing and
    # are skipped; interior tiles (ki < qi) take the unmasked fast path; only
    # the diagonal tile builds/applies the iota mask.
    @pl.when(ki < qi)
    def _interior():
        _online_update(_scores())

    @pl.when(ki == qi)
    def _diagonal():
        s = _scores()
        tq, tkv = s.shape[1], s.shape[2]
        row = lax.broadcasted_iota(jnp.int32, (tq, tkv), 0)
        col = lax.broadcasted_iota(jnp.int32, (tq, tkv), 1)
        # Finite large-negative mask value; scores stay in f32 here.
        s = jnp.where((col <= row)[None, :, :], s, -1e30)
        _online_update(s)

    @pl.when(ki == pl.num_programs(2) - 1)
    def _finalize():
        num_heads, _, head_dim = acc_sc.shape
        inv_l = pl.reciprocal(l_sc[...], approx=True)       # EUP slot
        ctx = acc_sc[...] * inv_l                           # (H, tq, hd) f32
        # Assemble head-concat layout with static lane slices so the fused
        # output projection is ONE full-depth (K = d_out) MXU contraction
        # instead of H K=head_dim matmuls plus a cross-head reduce.
        for h in range(num_heads):
            ctx_sc[:, h * head_dim:(h + 1) * head_dim] = ctx[h].astype(ctx_sc.dtype)
        out = jnp.dot(ctx_sc[...], wo_ref[...],
                      preferred_element_type=jnp.float32) + bo_ref[...]
        # TODO(synk): with d_out=32 this is a masked 32-lane vst; at real
        #             model widths (d_out >= 128) it becomes lane-dense.
        o_ref[0] = out.astype(o_ref.dtype)


# ---------------------------------------------------------------------------
# Wrapper
# ---------------------------------------------------------------------------
def multi_head_attention(x, wq, wk, wv, wo, bo, *, num_heads):
    """Forward pass equivalent to the PyTorch MultiHeadAttention module."""
    B, T, d_in = x.shape
    d_out = wq.shape[1]
    assert d_out % num_heads == 0
    head_dim = d_out // num_heads
    out_dtype = x.dtype
    vmem_limit = _vmem_limit_bytes()

    # ---- one-time weight prep: fused [Wq*scale | Wk | Wv], cast to bf16 ----
    scale = 1.0 / (float(head_dim) ** 0.5)
    w_qkv = jnp.concatenate([wq * scale, wk, wv], axis=1).astype(jnp.bfloat16)
    wo_bf = wo.astype(jnp.bfloat16)
    bo_f32 = bo.reshape(1, d_out).astype(jnp.float32)
    x_bf = x.astype(jnp.bfloat16)

    # ---- kernel 1: K-tiled fused QKV projection, head-major outputs -------
    tr = _pick_tile(T, 256, 8)        # row tile (sublane-aligned)
    tk = _pick_tile(d_in, 512, 128)   # contraction tile (lane-aligned)
    q, k, v = pl.pallas_call(
        qkv_proj_kernel,
        out_shape=tuple(
            jax.ShapeDtypeStruct((B, num_heads, T, head_dim), jnp.bfloat16)
            for _ in range(3)),
        grid=(B, T // tr, d_in // tk),
        in_specs=[
            pl.BlockSpec((1, tr, tk), lambda b, t, kk: (b, t, kk)),
            # Full-N weight tile (needed for the in-kernel head split); the K
            # axis is tiled so the block stays bounded at transformer widths.
            pl.BlockSpec((tk, 3 * d_out), lambda b, t, kk: (kk, 0)),
        ],
        out_specs=tuple(
            pl.BlockSpec((1, num_heads, tr, head_dim),
                         lambda b, t, kk: (b, 0, t, 0))
            for _ in range(3)),
        scratch_shapes=[pltpu.VMEM((tr, 3 * d_out), jnp.float32)],
        compiler_params=pltpu.CompilerParams(
            dimension_semantics=("parallel", "parallel", "arbitrary"),
            vmem_limit_bytes=vmem_limit),
    )(x_bf, w_qkv)

    # ---- kernel 2: flash attention + fused output projection --------------
    # Heads stay inside the kernel so the fused out-projection is one
    # full-depth contraction; the parallel grid is (B, T//tq).
    tq = _pick_tile(T, 128, 8)        # q == kv tile; v5e/v6e can go 256-512
    out = pl.pallas_call(
        flash_attn_kernel,
        out_shape=jax.ShapeDtypeStruct((B, T, d_out), out_dtype),
        grid=(B, T // tq, T // tq),
        in_specs=[
            pl.BlockSpec((1, num_heads, tq, head_dim),
                         lambda b, qi, ki: (b, 0, qi, 0)),
            pl.BlockSpec((1, num_heads, tq, head_dim),
                         lambda b, qi, ki: (b, 0, ki, 0)),
            pl.BlockSpec((1, num_heads, tq, head_dim),
                         lambda b, qi, ki: (b, 0, ki, 0)),
            pl.BlockSpec((d_out, d_out), lambda b, qi, ki: (0, 0)),
            pl.BlockSpec((1, d_out), lambda b, qi, ki: (0, 0)),
        ],
        out_specs=pl.BlockSpec((1, tq, d_out), lambda b, qi, ki: (b, qi, 0)),
        scratch_shapes=[
            pltpu.VMEM((num_heads, tq, 1), jnp.float32),          # m
            pltpu.VMEM((num_heads, tq, 1), jnp.float32),          # l
            pltpu.VMEM((num_heads, tq, head_dim), jnp.float32),   # acc (PV)
            pltpu.VMEM((tq, d_out), jnp.bfloat16),                # head-concat ctx
        ],
        compiler_params=pltpu.CompilerParams(
            dimension_semantics=("parallel", "parallel", "arbitrary"),
            vmem_limit_bytes=vmem_limit),
    )(q, k, v, wo_bf, bo_f32)
    return out


# ---------------------------------------------------------------------------
# Pure-JAX f32 reference mirroring the PyTorch forward exactly.
# ---------------------------------------------------------------------------
def mha_reference(x, wq, wk, wv, wo, bo, *, num_heads):
    B, T, d_in = x.shape
    d_out = wq.shape[1]
    head_dim = d_out // num_heads

    q = (x @ wq).reshape(B, T, num_heads, head_dim).transpose(0, 2, 1, 3)
    k = (x @ wk).reshape(B, T, num_heads, head_dim).transpose(0, 2, 1, 3)
    v = (x @ wv).reshape(B, T, num_heads, head_dim).transpose(0, 2, 1, 3)

    scores = jnp.einsum("bhqd,bhkd->bhqk", q, k)
    mask = jnp.triu(jnp.ones((T, T), dtype=bool), k=1)
    scores = jnp.where(mask[None, None], -jnp.inf, scores)
    weights = jax.nn.softmax(scores / (head_dim ** 0.5), axis=-1)
    ctx = jnp.einsum("bhqk,bhkd->bhqd", weights, v)
    ctx = ctx.transpose(0, 2, 1, 3).reshape(B, T, d_out)
    return ctx @ wo + bo[0]


if __name__ == "__main__":
    # Small shapes consistent with the module:
    #   batch=2, seq(num_tokens)=8, d_in=32, d_out=32, num_heads=4, dropout=0.0
    B, T, d_in, d_out, num_heads = 2, 8, 32, 32, 4

    key = jax.random.PRNGKey(0)
    kx, kq, kk_, kv_, ko, kb = jax.random.split(key, 6)

    x = jax.random.normal(kx, (B, T, d_in), dtype=jnp.float32)
    wq = jax.random.normal(kq, (d_in, d_out), dtype=jnp.float32) * 0.1
    wk = jax.random.normal(kk_, (d_in, d_out), dtype=jnp.float32) * 0.1
    wv = jax.random.normal(kv_, (d_in, d_out), dtype=jnp.float32) * 0.1
    wo = jax.random.normal(ko, (d_out, d_out), dtype=jnp.float32) * 0.1
    bo = jax.random.normal(kb, (1, d_out), dtype=jnp.float32) * 0.1

    out = multi_head_attention(x, wq, wk, wv, wo, bo, num_heads=num_heads)
    out = jax.block_until_ready(out)

    ref = mha_reference(x, wq, wk, wv, wo, bo, num_heads=num_heads)
    assert out.shape == (B, T, d_out)
    # bf16 inputs with f32 accumulation -> bf16-appropriate tolerance.
    assert jnp.allclose(out, ref, atol=3e-2, rtol=3e-2), "mismatch vs reference"

    print("KERNEL_OK")
</pallas_src>

<mosaic_0001>
module attributes {stable_mosaic.version = 11 : i64} {
  func.func @qkv_proj_kernel(%arg0: i32, %arg1: i32, %arg2: i32, %arg3: memref<1x8x32xbf16, #tpu.memory_space<vmem>>, %arg4: memref<32x96xbf16, #tpu.memory_space<vmem>>, %arg5: memref<1x4x8x8xbf16, #tpu.memory_space<vmem>>, %arg6: memref<1x4x8x8xbf16, #tpu.memory_space<vmem>>, %arg7: memref<1x4x8x8xbf16, #tpu.memory_space<vmem>>, %arg8: memref<8x96xf32, #tpu.memory_space<vmem>>) attributes {dimension_semantics = [#tpu.dimension_semantics<parallel>, #tpu.dimension_semantics<parallel>, #tpu.dimension_semantics<arbitrary>], iteration_bounds = array<i64: 2, 1, 1>, scalar_prefetch = 0 : i64, scratch_operands = 1 : i64, tpu.core_type = #tpu.core_type<tc>, window_params = [{transform_indices = @transform_0, window_bounds = array<i64: 1, 8, 32>}, {transform_indices = @transform_1, window_bounds = array<i64: 32, 96>}, {transform_indices = @transform_2, window_bounds = array<i64: 1, 4, 8, 8>}, {transform_indices = @transform_3, window_bounds = array<i64: 1, 4, 8, 8>}, {transform_indices = @transform_4, window_bounds = array<i64: 1, 4, 8, 8>}]} {
    %c0_i32 = arith.constant 0 : i32
    %0 = arith.cmpi eq, %arg2, %c0_i32 : i32
    %1 = arith.extui %0 : i1 to i32
    %c0_i32_0 = arith.constant 0 : i32
    %2 = arith.cmpi ne, %1, %c0_i32_0 : i32
    scf.if %2 {
      %cst_11 = arith.constant 0.000000e+00 : f32
      %13 = vector.broadcast %cst_11 : f32 to vector<8x96xf32>
      %c0_12 = arith.constant 0 : index
      %c0_13 = arith.constant 0 : index
      %14 = vector.load %arg8[%c0_12, %c0_13] : memref<8x96xf32, #tpu.memory_space<vmem>>, vector<8x96xf32>
      tpu.vector_store %arg8[%c0_12, %c0_13], %13 {strides = array<i32>} : memref<8x96xf32, #tpu.memory_space<vmem>>, vector<8x96xf32>,
    } else {
    }
    %c0 = arith.constant 0 : index
    %c0_1 = arith.constant 0 : index
    %3 = vector.load %arg8[%c0, %c0_1] : memref<8x96xf32, #tpu.memory_space<vmem>>, vector<8x96xf32>
    %c0_2 = arith.constant 0 : index
    %c0_3 = arith.constant 0 : index
    %c0_4 = arith.constant 0 : index
    %4 = vector.load %arg3[%c0_2, %c0_3, %c0_4] : memref<1x8x32xbf16, #tpu.memory_space<vmem>>, vector<1x8x32xbf16>
    %5 = vector.shape_cast %4 : vector<1x8x32xbf16> to vector<8x32xbf16>
    %c0_5 = arith.constant 0 : index
    %c0_6 = arith.constant 0 : index
    %6 = vector.load %arg4[%c0_5, %c0_6] : memref<32x96xbf16, #tpu.memory_space<vmem>>, vector<32x96xbf16>
    %cst = arith.constant dense<0.000000e+00> : vector<8x96xf32>
    %7 = tpu.matmul %5, %6, %cst {dimension_numbers = #tpu.dot_dimension_numbers<[1], [0], [0], [1], [0, 0, 1, 1], [], []>} : vector<8x32xbf16>, vector<32x96xbf16>, vector<8x96xf32> -> vector<8x96xf32>
    %8 = arith.addf %3, %7 : vector<8x96xf32>
    %c0_7 = arith.constant 0 : index
    %c0_8 = arith.constant 0 : index
    %9 = vector.load %arg8[%c0_7, %c0_8] : memref<8x96xf32, #tpu.memory_space<vmem>>, vector<8x96xf32>
    tpu.vector_store %arg8[%c0_7, %c0_8], %8 {strides = array<i32>} : memref<8x96xf32, #tpu.memory_space<vmem>>, vector<8x96xf32>,
    %c0_i32_9 = arith.constant 0 : i32
    %10 = arith.cmpi eq, %arg2, %c0_i32_9 : i32
    %11 = arith.extui %10 : i1 to i32
    %c0_i32_10 = arith.constant 0 : i32
    %12 = arith.cmpi ne, %11, %c0_i32_10 : i32
    scf.if %12 {
      %c0_11 = arith.constant 0 : index
      %c0_12 = arith.constant 0 : index
      %13 = vector.load %arg8[%c0_11, %c0_12] : memref<8x96xf32, #tpu.memory_space<vmem>>, vector<8x96xf32>
      %14 = vector.extract_strided_slice %13 {offsets = [0, 0], sizes = [8, 8], strides = [1, 1]} : vector<8x96xf32> to vector<8x8xf32>
      %15 = arith.truncf %14 : vector<8x8xf32> to vector<8x8xbf16>
      %c0_13 = arith.constant 0 : index
      %c0_14 = arith.constant 0 : index
      %c0_15 = arith.constant 0 : index
      %c0_16 = arith.constant 0 : index
      %16 = vector.load %arg5[%c0_13, %c0_14, %c0_15, %c0_16] : memref<1x4x8x8xbf16, #tpu.memory_space<vmem>>, vector<1x1x8x8xbf16>
      %17 = vector.shape_cast %16 : vector<1x1x8x8xbf16> to vector<8x8xbf16>
      %18 = vector.shape_cast %15 : vector<8x8xbf16> to vector<1x1x8x8xbf16>
      tpu.vector_store %arg5[%c0_13, %c0_14, %c0_15, %c0_16], %18 {strides = array<i32>} : memref<1x4x8x8xbf16, #tpu.memory_space<vmem>>, vector<1x1x8x8xbf16>,
      %19 = vector.extract_strided_slice %13 {offsets = [0, 32], sizes = [8, 8], strides = [1, 1]} : vector<8x96xf32> to vector<8x8xf32>
      %20 = arith.truncf %19 : vector<8x8xf32> to vector<8x8xbf16>
      %c0_17 = arith.constant 0 : index
      %c0_18 = arith.constant 0 : index
      %c0_19 = arith.constant 0 : index
      %c0_20 = arith.constant 0 : index
      %21 = vector.load %arg6[%c0_17, %c0_18, %c0_19, %c0_20] : memref<1x4x8x8xbf16, #tpu.memory_space<vmem>>, vector<1x1x8x8xbf16>
      %22 = vector.shape_cast %21 : vector<1x1x8x8xbf16> to vector<8x8xbf16>
      %23 = vector.shape_cast %20 : vector<8x8xbf16> to vector<1x1x8x8xbf16>
      tpu.vector_store %arg6[%c0_17, %c0_18, %c0_19, %c0_20], %23 {strides = array<i32>} : memref<1x4x8x8xbf16, #tpu.memory_space<vmem>>, vector<1x1x8x8xbf16>,
      %24 = vector.extract_strided_slice %13 {offsets = [0, 64], sizes = [8, 8], strides = [1, 1]} : vector<8x96xf32> to vector<8x8xf32>
      %25 = arith.truncf %24 : vector<8x8xf32> to vector<8x8xbf16>
      %c0_21 = arith.constant 0 : index
      %c0_22 = arith.constant 0 : index
      %c0_23 = arith.constant 0 : index
      %c0_24 = arith.constant 0 : index
      %26 = vector.load %arg7[%c0_21, %c0_22, %c0_23, %c0_24] : memref<1x4x8x8xbf16, #tpu.memory_space<vmem>>, vector<1x1x8x8xbf16>
      %27 = vector.shape_cast %26 : vector<1x1x8x8xbf16> to vector<8x8xbf16>
      %28 = vector.shape_cast %25 : vector<8x8xbf16> to vector<1x1x8x8xbf16>
      tpu.vector_store %arg7[%c0_21, %c0_22, %c0_23, %c0_24], %28 {strides = array<i32>} : memref<1x4x8x8xbf16, #tpu.memory_space<vmem>>, vector<1x1x8x8xbf16>,
      %29 = vector.extract_strided_slice %13 {offsets = [0, 8], sizes = [8, 8], strides = [1, 1]} : vector<8x96xf32> to vector<8x8xf32>
      %30 = arith.truncf %29 : vector<8x8xf32> to vector<8x8xbf16>
      %c0_25 = arith.constant 0 : index
      %c1 = arith.constant 1 : index
      %c0_26 = arith.constant 0 : index
      %c0_27 = arith.constant 0 : index
      %31 = vector.load %arg5[%c0_25, %c1, %c0_26, %c0_27] : memref<1x4x8x8xbf16, #tpu.memory_space<vmem>>, vector<1x1x8x8xbf16>
      %32 = vector.shape_cast %31 : vector<1x1x8x8xbf16> to vector<8x8xbf16>
      %33 = vector.shape_cast %30 : vector<8x8xbf16> to vector<1x1x8x8xbf16>
      tpu.vector_store %arg5[%c0_25, %c1, %c0_26, %c0_27], %33 {strides = array<i32>} : memref<1x4x8x8xbf16, #tpu.memory_space<vmem>>, vector<1x1x8x8xbf16>,
      %34 = vector.extract_strided_slice %13 {offsets = [0, 40], sizes = [8, 8], strides = [1, 1]} : vector<8x96xf32> to vector<8x8xf32>
      %35 = arith.truncf %34 : vector<8x8xf32> to vector<8x8xbf16>
      %c0_28 = arith.constant 0 : index
      %c1_29 = arith.constant 1 : index
      %c0_30 = arith.constant 0 : index
      %c0_31 = arith.constant 0 : index
      %36 = vector.load %arg6[%c0_28, %c1_29, %c0_30, %c0_31] : memref<1x4x8x8xbf16, #tpu.memory_space<vmem>>, vector<1x1x8x8xbf16>
      %37 = vector.shape_cast %36 : vector<1x1x8x8xbf16> to vector<8x8xbf16>
      %38 = vector.shape_cast %35 : vector<8x8xbf16> to vector<1x1x8x8xbf16>
      tpu.vector_store %arg6[%c0_28, %c1_29, %c0_30, %c0_31], %38 {strides = array<i32>} : memref<1x4x8x8xbf16, #tpu.memory_space<vmem>>, vector<1x1x8x8xbf16>,
      %39 = vector.extract_strided_slice %13 {offsets = [0, 72], sizes = [8, 8], strides = [1, 1]} : vector<8x96xf32> to vector<8x8xf32>
      %40 = arith.truncf %39 : vector<8x8xf32> to vector<8x8xbf16>
      %c0_32 = arith.constant 0 : index
      %c1_33 = arith.constant 1 : index
      %c0_34 = arith.constant 0 : index
      %c0_35 = arith.constant 0 : index
      %41 = vector.load %arg7[%c0_32, %c1_33, %c0_34, %c0_35] : memref<1x4x8x8xbf16, #tpu.memory_space<vmem>>, vector<1x1x8x8xbf16>
      %42 = vector.shape_cast %41 : vector<1x1x8x8xbf16> to vector<8x8xbf16>
      %43 = vector.shape_cast %40 : vector<8x8xbf16> to vector<1x1x8x8xbf16>
      tpu.vector_store %arg7[%c0_32, %c1_33, %c0_34, %c0_35], %43 {strides = array<i32>} : memref<1x4x8x8xbf16, #tpu.memory_space<vmem>>, vector<1x1x8x8xbf16>,
      %44 = vector.extract_strided_slice %13 {offsets = [0, 16], sizes = [8, 8], strides = [1, 1]} : vector<8x96xf32> to vector<8x8xf32>
      %45 = arith.truncf %44 : vector<8x8xf32> to vector<8x8xbf16>
      %c0_36 = arith.constant 0 : index
      %c2 = arith.constant 2 : index
      %c0_37 = arith.constant 0 : index
      %c0_38 = arith.constant 0 : index
      %46 = vector.load %arg5[%c0_36, %c2, %c0_37, %c0_38] : memref<1x4x8x8xbf16, #tpu.memory_space<vmem>>, vector<1x1x8x8xbf16>
      %47 = vector.shape_cast %46 : vector<1x1x8x8xbf16> to vector<8x8xbf16>
      %48 = vector.shape_cast %45 : vector<8x8xbf16> to vector<1x1x8x8xbf16>
      tpu.vector_store %arg5[%c0_36, %c2, %c0_37, %c0_38], %48 {strides = array<i32>} : memref<1x4x8x8xbf16, #tpu.memory_space<vmem>>, vector<1x1x8x8xbf16>,
      %49 = vector.extract_strided_slice %13 {offsets = [0, 48], sizes = [8, 8], strides = [1, 1]} : vector<8x96xf32> to vector<8x8xf32>
      %50 = arith.truncf %49 : vector<8x8xf32> to vector<8x8xbf16>
      %c0_39 = arith.constant 0 : index
      %c2_40 = arith.constant 2 : index
      %c0_41 = arith.constant 0 : index
      %c0_42 = arith.constant 0 : index
      %51 = vector.load %arg6[%c0_39, %c2_40, %c0_41, %c0_42] : memref<1x4x8x8xbf16, #tpu.memory_space<vmem>>, vector<1x1x8x8xbf16>
      %52 = vector.shape_cast %51 : vector<1x1x8x8xbf16> to vector<8x8xbf16>
      %53 = vector.shape_cast %50 : vector<8x8xbf16> to vector<1x1x8x8xbf16>
      tpu.vector_store %arg6[%c0_39, %c2_40, %c0_41, %c0_42], %53 {strides = array<i32>} : memref<1x4x8x8xbf16, #tpu.memory_space<vmem>>, vector<1x1x8x8xbf16>,
      %54 = vector.extract_strided_slice %13 {offsets = [0, 80], sizes = [8, 8], strides = [1, 1]} : vector<8x96xf32> to vector<8x8xf32>
      %55 = arith.truncf %54 : vector<8x8xf32> to vector<8x8xbf16>
      %c0_43 = arith.constant 0 : index
      %c2_44 = arith.constant 2 : index
      %c0_45 = arith.constant 0 : index
      %c0_46 = arith.constant 0 : index
      %56 = vector.load %arg7[%c0_43, %c2_44, %c0_45, %c0_46] : memref<1x4x8x8xbf16, #tpu.memory_space<vmem>>, vector<1x1x8x8xbf16>
      %57 = vector.shape_cast %56 : vector<1x1x8x8xbf16> to vector<8x8xbf16>
      %58 = vector.shape_cast %55 : vector<8x8xbf16> to vector<1x1x8x8xbf16>
      tpu.vector_store %arg7[%c0_43, %c2_44, %c0_45, %c0_46], %58 {strides = array<i32>} : memref<1x4x8x8xbf16, #tpu.memory_space<vmem>>, vector<1x1x8x8xbf16>,
      %59 = vector.extract_strided_slice %13 {offsets = [0, 24], sizes = [8, 8], strides = [1, 1]} : vector<8x96xf32> to vector<8x8xf32>
      %60 = arith.truncf %59 : vector<8x8xf32> to vector<8x8xbf16>
      %c0_47 = arith.constant 0 : index
      %c3 = arith.constant 3 : index
      %c0_48 = arith.constant 0 : index
      %c0_49 = arith.constant 0 : index
      %61 = vector.load %arg5[%c0_47, %c3, %c0_48, %c0_49] : memref<1x4x8x8xbf16, #tpu.memory_space<vmem>>, vector<1x1x8x8xbf16>
      %62 = vector.shape_cast %61 : vector<1x1x8x8xbf16> to vector<8x8xbf16>
      %63 = vector.shape_cast %60 : vector<8x8xbf16> to vector<1x1x8x8xbf16>
      tpu.vector_store %arg5[%c0_47, %c3, %c0_48, %c0_49], %63 {strides = array<i32>} : memref<1x4x8x8xbf16, #tpu.memory_space<vmem>>, vector<1x1x8x8xbf16>,
      %64 = vector.extract_strided_slice %13 {offsets = [0, 56], sizes = [8, 8], strides = [1, 1]} : vector<8x96xf32> to vector<8x8xf32>
      %65 = arith.truncf %64 : vector<8x8xf32> to vector<8x8xbf16>
      %c0_50 = arith.constant 0 : index
      %c3_51 = arith.constant 3 : index
      %c0_52 = arith.constant 0 : index
      %c0_53 = arith.constant 0 : index
      %66 = vector.load %arg6[%c0_50, %c3_51, %c0_52, %c0_53] : memref<1x4x8x8xbf16, #tpu.memory_space<vmem>>, vector<1x1x8x8xbf16>
      %67 = vector.shape_cast %66 : vector<1x1x8x8xbf16> to vector<8x8xbf16>
      %68 = vector.shape_cast %65 : vector<8x8xbf16> to vector<1x1x8x8xbf16>
      tpu.vector_store %arg6[%c0_50, %c3_51, %c0_52, %c0_53], %68 {strides = array<i32>} : memref<1x4x8x8xbf16, #tpu.memory_space<vmem>>, vector<1x1x8x8xbf16>,
      %69 = vector.extract_strided_slice %13 {offsets = [0, 88], sizes = [8, 8], strides = [1, 1]} : vector<8x96xf32> to vector<8x8xf32>
      %70 = arith.truncf %69 : vector<8x8xf32> to vector<8x8xbf16>
      %c0_54 = arith.constant 0 : index
      %c3_55 = arith.constant 3 : index
      %c0_56 = arith.constant 0 : index
      %c0_57 = arith.constant 0 : index
      %71 = vector.load %arg7[%c0_54, %c3_55, %c0_56, %c0_57] : memref<1x4x8x8xbf16, #tpu.memory_space<vmem>>, vector<1x1x8x8xbf16>
      %72 = vector.shape_cast %71 : vector<1x1x8x8xbf16> to vector<8x8xbf16>
      %73 = vector.shape_cast %70 : vector<8x8xbf16> to vector<1x1x8x8xbf16>
      tpu.vector_store %arg7[%c0_54, %c3_55, %c0_56, %c0_57], %73 {strides = array<i32>} : memref<1x4x8x8xbf16, #tpu.memory_space<vmem>>, vector<1x1x8x8xbf16>,
    } else {
    }
    return
  }
  func.func @transform_0(%arg0: i32, %arg1: i32, %arg2: i32) -> (i32, i32, i32) {
    %c0_i32 = arith.constant 0 : i32
    return %arg0, %arg1, %arg2 : i32, i32, i32
  }
  func.func @transform_1(%arg0: i32, %arg1: i32, %arg2: i32) -> (i32, i32) {
    %c0_i32 = arith.constant 0 : i32
    %c0_i32_0 = arith.constant 0 : i32
    return %arg2, %c0_i32 : i32, i32
  }
  func.func @transform_2(%arg0: i32, %arg1: i32, %arg2: i32) -> (i32, i32, i32, i32) {
    %c0_i32 = arith.constant 0 : i32
    %c0_i32_0 = arith.constant 0 : i32
    %c0_i32_1 = arith.constant 0 : i32
    return %arg0, %c0_i32, %arg1, %c0_i32_0 : i32, i32, i32, i32
  }
  func.func @transform_3(%arg0: i32, %arg1: i32, %arg2: i32) -> (i32, i32, i32, i32) {
    %c0_i32 = arith.constant 0 : i32
    %c0_i32_0 = arith.constant 0 : i32
    %c0_i32_1 = arith.constant 0 : i32
    return %arg0, %c0_i32, %arg1, %c0_i32_0 : i32, i32, i32, i32
  }
  func.func @transform_4(%arg0: i32, %arg1: i32, %arg2: i32) -> (i32, i32, i32, i32) {
    %c0_i32 = arith.constant 0 : i32
    %c0_i32_0 = arith.constant 0 : i32
    %c0_i32_1 = arith.constant 0 : i32
    return %arg0, %c0_i32, %arg1, %c0_i32_0 : i32, i32, i32, i32
  }
}

</mosaic_0001>

<llo_original>
// kernel: tpu_custom_call.1
$region0: #{tpu_custom_call.1}
  #allocation0 [shape = 'u32[]', space=smem, size = 0x4, offset = 0x4, fixed_abs, tag = 'smem constant byte address 0x4 - core index']
  #allocation1 [shape = 'u32[144,128]{1,0:T(1,128)}', space=vmem, size = 0x12000, scoped, tag = 'internal scratch']
  #allocation2 [shape = 'f32[8,96]{1,0:T(8,128)}', space=vmem, size = 0x1000, scoped, tag = 'scratch operand']
  %s0 = inlined_call_operand.hbm [shape: bf16[2,8,32], index: 0, kind: input, shape index: {}]
  %s1 = inlined_call_operand.hbm [shape: bf16[32,96], index: 1, kind: input, shape index: {}]
  %s2 = inlined_call_operand.hbm [shape: bf16[2,4,8,8], index: 2, kind: output, shape index: {0}]
  %s3 = inlined_call_operand.hbm [shape: bf16[2,4,8,8], index: 3, kind: output, shape index: {1}]
  %s4 = inlined_call_operand.hbm [shape: bf16[2,4,8,8], index: 4, kind: output, shape index: {2}]
  %5 = xla_tuple %s2, %s3, %s4
  %s6 = sld [smem:[#allocation0]]
  $region73: #{tpu_custom_call.1} parent=0
    _
  %s8 = ssub.s32 1, %s6
  %s9 = scalar_select 0, %s8, %s6
  $region1: #{tpu_custom_call.1} parent=0
    #allocation3 [shape = 'u8[4096]{0}', space=vmem, size = 0x1000, scoped, tag = 'input window, operand 0']
    #allocation4 [shape = 's32[2]{0}', space=sflag, size = 0x8, scoped, tag = 'scoped memory for tpu_custom_call.1']
    #allocation5 [shape = 's32[2]{0}', space=sflag, size = 0x8, scoped, tag = 'scoped memory for tpu_custom_call.1']
    #allocation6 [shape = 'u8[8192]{0}', space=vmem, size = 0x2000, scoped, tag = 'input window, operand 1, single buffered']
    #allocation7 [shape = 's32[1]{0}', space=sflag, size = 0x4, scoped, tag = 'scoped memory for tpu_custom_call.1']
    #allocation8 [shape = 'u8[16384]{0}', space=vmem, size = 0x4000, scoped, tag = 'output window, operand 0']
    #allocation9 [shape = 'u8[16384]{0}', space=vmem, size = 0x4000, scoped, tag = 'output window, operand 1']
    #allocation10 [shape = 's32[2]{0}', space=sflag, size = 0x8, scoped, tag = 'scoped memory for tpu_custom_call.1']
    #allocation11 [shape = 'u8[16384]{0}', space=vmem, size = 0x4000, scoped, tag = 'output window, operand 2']
    %10 = vsyncpa [#allocation4], 0
    %s11 = scalar_lea.sflag [#allocation4], 1
    %12 = vsyncpa %s11, 0
    %13 = vsyncpa [#allocation7], 0
    %14 = vsyncpa [#allocation5], 0
    %s15 = scalar_lea.sflag [#allocation5], 1
    %16 = vsyncpa %s15, 0
    %17 = vsyncpa [#allocation10], 0
    %s18 = scalar_lea.sflag [#allocation10], 1
    %19 = vsyncpa %s18, 0
    loop: start=0, step=1, limit=4
    $region2: #{tpu_custom_call.1} parent=1 // loop_pre_header
      _
    $region3: #{tpu_custom_call.1} parent=1 // loop_header
      %s21 = sphi 0, %s25
      %p22 = scmp.ge.s32.totalorder %s21, 4
      %s28 = sphi 0, %s47
      %s29 = sphi 0, %s43
      %s30 = sphi 0, %s39
      %s31 = sphi 0, %s28
      %s32 = sphi 0, %s29
      %s33 = sphi 0, %s30
      %s34 = sphi 0, %s31
      %s35 = sphi 0, %s32
      %s36 = sphi 0, %s33
      %s54 = sphi 0, %s56
      %s57 = sphi 0, %s54
      %s58 = sphi 0, %s57
      %s74 = sphi 0, %s58
      %s80 = sphi 0, %s82
      %s83 = sphi 0, %s80
      %s84 = sphi 0, %s83
      %s100 = sphi 0, %s84
      %s108 = sphi 0, %s110
      %s111 = sphi 0, %s108
      %s112 = sphi 0, %s111
      %s128 = sphi 0, %s112
      %s136 = sphi 0, %s138
      %s139 = sphi 0, %s136
      %s140 = sphi 0, %s139
      %s156 = sphi 0, %s140
      %s164 = sphi 0, %s166
      %s167 = sphi 0, %s164
      %s168 = sphi 0, %s167
      %s184 = sphi 0, %s168
    $region4: #{tpu_custom_call.1} parent=1 // loop_header_branch
      %24 = sbr.rel (%p22) target = $region8
    $region5: #{tpu_custom_call.1} parent=1 // loop_body
      %s26 = ssub.s32 %s21, 1
      %s27 = ssub.s32 %s21, 2
      %s37 = sadd.s32 1, %s30
      %p38 = scmp.ge.s32.totalorder %s37, 1
      %s39 = scalar_select %p38, 0, %s37
      %s40 = sadd.s32 1, %s29
      %s41 = scalar_select %p38, %s40, %s29
      %p42 = scmp.ge.s32.totalorder %s41, 1
      %s43 = scalar_select %p42, 0, %s41
      %s44 = sadd.s32 1, %s28
      %s45 = scalar_select %p42, %s44, %s28
      %p46 = scmp.ge.s32.totalorder %s45, 2
      %s47 = scalar_select %p46, 0, %s45
      %s48 = ssub.s32 %s28, %s47
      %s49 = ssub.s32 %s29, %s43
      %s50 = sor.u32 %s48, %s49
      %s51 = ssub.s32 %s30, %s39
      %s52 = sor.u32 %s50, %s51
      %p53 = scmp.eq.s32.totalorder %s52, 0
      %s55 = sadd.s32 %s54, 1
      %s56 = scalar_select %p53, %s54, %s55
      %p59 = pneg %p53
      %p60 = scmp.eq.s32.totalorder %s21, 1
      %p61 = por %p59, %p60
      %p62 = scmp.ne.s32.totalorder %s54, %s57
      %p63 = scmp.eq.s32.totalorder %s21, 0
      %p64 = por %p62, %p63
      %p65 = scmp.ne.s32.totalorder %s54, %s57
      %p66 = scmp.eq.s32.totalorder %s26, 1
      %p67 = por %p65, %p66
      %p68 = scmp.ne.s32.totalorder %s57, %s58
      %p69 = scmp.eq.s32.totalorder %s26, 0
      %p70 = por %p68, %p69
      %p71 = scmp.ne.s32.totalorder %s57, %s58
      %p72 = scmp.eq.s32.totalorder %s27, 1
      %p73 = por %p71, %p72
      %p75 = scmp.ne.s32.totalorder %s58, %s74
      %p76 = scmp.eq.s32.totalorder %s27, 0
      %p77 = por %p75, %p76
      %s78 = ssub.s32 %s30, %s39
      %p79 = scmp.eq.s32.totalorder %s78, 0
      %s81 = sadd.s32 %s80, 1
      %s82 = scalar_select %p79, %s80, %s81
      %p85 = pneg %p79
      %p86 = scmp.eq.s32.totalorder %s21, 1
      %p87 = por %p85, %p86
      %p88 = scmp.ne.s32.totalorder %s80, %s83
      %p89 = scmp.eq.s32.totalorder %s21, 0
      %p90 = por %p88, %p89
      %p91 = scmp.ne.s32.totalorder %s80, %s83
      %p92 = scmp.eq.s32.totalorder %s26, 1
      %p93 = por %p91, %p92
      %p94 = scmp.ne.s32.totalorder %s83, %s84
      %p95 = scmp.eq.s32.totalorder %s26, 0
      %p96 = por %p94, %p95
      %p97 = scmp.ne.s32.totalorder %s83, %s84
      %p98 = scmp.eq.s32.totalorder %s27, 1
      %p99 = por %p97, %p98
      %p101 = scmp.ne.s32.totalorder %s84, %s100
      %p102 = scmp.eq.s32.totalorder %s27, 0
      %p103 = por %p101, %p102
      %s104 = ssub.s32 %s28, %s47
      %s105 = ssub.s32 %s29, %s43
      %s106 = sor.u32 %s104, %s105
      %p107 = scmp.eq.s32.totalorder %s106, 0
      %s109 = sadd.s32 %s108, 1
      %s110 = scalar_select %p107, %s108, %s109
      %p113 = pneg %p107
      %p114 = scmp.eq.s32.totalorder %s21, 1
      %p115 = por %p113, %p114
      %p116 = scmp.ne.s32.totalorder %s108, %s111
      %p117 = scmp.eq.s32.totalorder %s21, 0
      %p118 = por %p116, %p117
      %p119 = scmp.ne.s32.totalorder %s108, %s111
      %p120 = scmp.eq.s32.totalorder %s26, 1
      %p121 = por %p119, %p120
      %p122 = scmp.ne.s32.totalorder %s111, %s112
      %p123 = scmp.eq.s32.totalorder %s26, 0
      %p124 = por %p122, %p123
      %p125 = scmp.ne.s32.totalorder %s111, %s112
      %p126 = scmp.eq.s32.totalorder %s27, 1
      %p127 = por %p125, %p126
      %p129 = scmp.ne.s32.totalorder %s112, %s128
      %p130 = scmp.eq.s32.totalorder %s27, 0
      %p131 = por %p129, %p130
      %s132 = ssub.s32 %s28, %s47
      %s133 = ssub.s32 %s29, %s43
      %s134 = sor.u32 %s132, %s133
      %p135 = scmp.eq.s32.totalorder %s134, 0
      %s137 = sadd.s32 %s136, 1
      %s138 = scalar_select %p135, %s136, %s137
      %p141 = pneg %p135
      %p142 = scmp.eq.s32.totalorder %s21, 1
      %p143 = por %p141, %p142
      %p144 = scmp.ne.s32.totalorder %s136, %s139
      %p145 = scmp.eq.s32.totalorder %s21, 0
      %p146 = por %p144, %p145
      %p147 = scmp.ne.s32.totalorder %s136, %s139
      %p148 = scmp.eq.s32.totalorder %s26, 1
      %p149 = por %p147, %p148
      %p150 = scmp.ne.s32.totalorder %s139, %s140
      %p151 = scmp.eq.s32.totalorder %s26, 0
      %p152 = por %p150, %p151
      %p153 = scmp.ne.s32.totalorder %s139, %s140
      %p154 = scmp.eq.s32.totalorder %s27, 1
      %p155 = por %p153, %p154
      %p157 = scmp.ne.s32.totalorder %s140, %s156
      %p158 = scmp.eq.s32.totalorder %s27, 0
      %p159 = por %p157, %p158
      %s160 = ssub.s32 %s28, %s47
      %s161 = ssub.s32 %s29, %s43
      %s162 = sor.u32 %s160, %s161
      %p163 = scmp.eq.s32.totalorder %s162, 0
      %s165 = sadd.s32 %s164, 1
      %s166 = scalar_select %p163, %s164, %s165
      %p169 = pneg %p163
      %p170 = scmp.eq.s32.totalorder %s21, 1
      %p171 = por %p169, %p170
      %p172 = scmp.ne.s32.totalorder %s164, %s167
      %p173 = scmp.eq.s32.totalorder %s21, 0
      %p174 = por %p172, %p173
      %p175 = scmp.ne.s32.totalorder %s164, %s167
      %p176 = scmp.eq.s32.totalorder %s26, 1
      %p177 = por %p175, %p176
      %p178 = scmp.ne.s32.totalorder %s167, %s168
      %p179 = scmp.eq.s32.totalorder %s26, 0
      %p180 = por %p178, %p179
      %p181 = scmp.ne.s32.totalorder %s167, %s168
      %p182 = scmp.eq.s32.totalorder %s27, 1
      %p183 = por %p181, %p182
      %p185 = scmp.ne.s32.totalorder %s168, %s184
      %p186 = scmp.eq.s32.totalorder %s27, 0
      %p187 = por %p185, %p186
      %p188 = scmp.le.s32.totalorder 1, %s21
      %p189 = scmp.lt.s32.totalorder %s21, 3
      %p190 = pnand %p188, %p189
      %p191 = pneg %p190
      // Predicated region
      $region9: #{tpu_custom_call.1} parent=5 // pred_check
        _
      $region10: #{tpu_custom_call.1} parent=5 // pred_check_branch
        %193 = sbr.rel (%p190) target = $region12
      $region11: #{tpu_custom_call.1} parent=5 // pred_region
        %s194 = ssub.s32 %s21, 1
        // Predicated region
        $region13: #{tpu_custom_call.1} parent=11 // pred_check
          %p195 = pneg %p96
        $region14: #{tpu_custom_call.1} parent=11 // pred_check_branch
          %197 = sbr.rel (%p195) target = $region16
        $region15: #{tpu_custom_call.1} parent=11 // pred_region
          %s198 = smul.u32 4, %s33
          %s200 = ssub.s32 256, 256
          %201 = vsyncadd [#allocation7], %s200
          %s202 = smul.addr %s198, 64
          %s203 = scalar_lea.hbm %s1, %s202
          %s204 = sshll.u32 [#allocation6], 4
          %s205 = int_to_ptr.vmem [resolvable:$true] %s204
          %210 = dma.hbm_to_vmem [thread:$0]  %s203, 256, %s205, [#allocation7], 64, 64, 4
        $region16: #{tpu_custom_call.1} parent=11 // pred_fallthru
          _
      $region12: #{tpu_custom_call.1} parent=5 // pred_fallthru
        _
      %p211 = scmp.lt.s32.totalorder %s21, 2
      // Predicated region
      $region17: #{tpu_custom_call.1} parent=5 // pred_check
        %p212 = pneg %p211
      $region18: #{tpu_custom_call.1} parent=5 // pred_check_branch
        %214 = sbr.rel (%p212) target = $region20
      $region19: #{tpu_custom_call.1} parent=5 // pred_region
        // Predicated region
        $region21: #{tpu_custom_call.1} parent=19 // pred_check
          %p215 = pneg %p64
        $region22: #{tpu_custom_call.1} parent=19 // pred_check_branch
          %217 = sbr.rel (%p215) target = $region24
        $region23: #{tpu_custom_call.1} parent=19 // pred_region
          %s218 = sand.u32 %s54, 1
          %s219 = scalar_lea.sflag [#allocation4], %s218
          %s220 = sand.u32 %s54, 1
          %s221 = smul.addr %s220, 4
          %s222 = scalar_lea.vmem [#allocation3], %s221
          %s224 = ssub.s32 64, 64
          %225 = vsyncadd %s219, %s224
          %s226 = sadd.s32 %s30, %s29
          %s227 = sadd.s32 %s226, %s28
          %s228 = smul.addr %s227, 64
          %s229 = scalar_lea.hbm %s0, %s228
          %s231 = sshll.u32 %s222, 4
          %s232 = int_to_ptr.vmem [resolvable:$true] %s231
          %234 = dma.hbm_to_vmem [thread:$0]  %s229, 64, %s232, %s219
        $region24: #{tpu_custom_call.1} parent=19 // pred_fallthru
          _
      $region20: #{tpu_custom_call.1} parent=5 // pred_fallthru
        _
      %p235 = scmp.le.s32.totalorder 1, %s21
      %p236 = scmp.lt.s32.totalorder %s21, 3
      %p237 = pnand %p235, %p236
      %p238 = pneg %p237
      // Predicated region
      $region25: #{tpu_custom_call.1} parent=5 // pred_check
        _
      $region26: #{tpu_custom_call.1} parent=5 // pred_check_branch
        %240 = sbr.rel (%p237) target = $region28
      $region27: #{tpu_custom_call.1} parent=5 // pred_region
        %s241 = ssub.s32 %s21, 1
        %s242 = sand.u32 %s57, 1
        %s243 = scalar_lea.sflag [#allocation4], %s242
        %s244 = sand.u32 %s57, 1
        %s245 = smul.addr %s244, 4
        %s246 = scalar_lea.vmem [#allocation3], %s245
        // Predicated region
        $region29: #{tpu_custom_call.1} parent=27 // pred_check
          %p247 = pneg %p70
        $region30: #{tpu_custom_call.1} parent=27 // pred_check_branch
          %249 = sbr.rel (%p247) target = $region32
        $region31: #{tpu_custom_call.1} parent=27 // pred_region
          %250 = dma.done %s243, 64
        $region32: #{tpu_custom_call.1} parent=27 // pred_fallthru
          _
        // Predicated region
        $region33: #{tpu_custom_call.1} parent=27 // pred_check
          %p251 = pneg %p96
        $region34: #{tpu_custom_call.1} parent=27 // pred_check_branch
          %253 = sbr.rel (%p251) target = $region36
        $region35: #{tpu_custom_call.1} parent=27 // pred_region
          %254 = dma.done [#allocation7], 256
        $region36: #{tpu_custom_call.1} parent=27 // pred_fallthru
          _
        %s255 = sand.u32 %s57, 1
        %s256 = scalar_lea.sflag [#allocation4], %s255
        %s257 = sand.u32 %s57, 1
        %s258 = smul.addr %s257, 4
        %s259 = scalar_lea.vmem [#allocation3], %s258
        %p260 = pneg %p70
        %p261 = pneg %p67
        %p262 = pneg %p96
        %p263 = pneg %p93
        %p264 = pneg %p124
        %p265 = pneg %p121
        %s266 = sand.u32 %s111, 1
        %s267 = scalar_lea.sflag [#allocation5], %s266
        %s268 = sand.u32 %s111, 1
        %s269 = smul.addr %s268, 16
        %s270 = scalar_lea.vmem [#allocation8], %s269
        %p271 = pneg %p152
        %p272 = pneg %p149
        %s273 = sand.u32 %s26, 1
        %s274 = scalar_lea.sflag [#allocation10], %s273
        %s275 = sand.u32 %s139, 1
        %s276 = smul.addr %s275, 16
        %s277 = scalar_lea.vmem [#allocation9], %s276
        %p278 = pneg %p180
        %p279 = pneg %p177
        %s280 = sand.u32 %s26, 1
        %s281 = scalar_lea.sflag [#allocation10], %s280
        %s282 = sand.u32 %s167, 1
        %s283 = smul.addr %s282, 16
        %s284 = scalar_lea.vmem [#allocation11], %s283
        %s285 = smul.u32 4, %s33
        %p287 = scmp.eq.s32.totalorder %s33, 0
        // Predicated region
        $region37: #{tpu_custom_call.1} parent=27 // pred_check
          %p288 = pneg %p287
        $region38: #{tpu_custom_call.1} parent=27 // pred_check_branch
          %290 = sbr.rel (%p288) target = $region40
        $region39: #{tpu_custom_call.1} parent=27 // pred_region
          %vm291 = vcmask 785408
          %292 = vst.msk [vmem:[#allocation2] sm:$0xff] %vm291, 0.0
        $region40: #{tpu_custom_call.1} parent=27 // pred_fallthru
          _
        %v293 = vld [vmem:[#allocation2] sm:$0xff]
        %v294 = vld [vmem:[%s246] sm:$0xf]
        %v295 = vld [vmem:[#allocation6] sm:$0xf]
        %v296 = vld [vmem:[#allocation6 + $0x4] sm:$0xf]
        %v297 = vld [vmem:[#allocation6 + $0x8] sm:$0xf]
        %v298 = vld [vmem:[#allocation6 + $0xc] sm:$0xf]
        %v303 = vunpack.c.l.b16 %v295
        %v304 = vunpack.c.l.b16 %v296
        %v305 = vunpack.c.l.b16 %v297
        %v306 = vunpack.c.l.b16 %v298
        %v307 = vpack.c.b16 %v304, %v303
        %v308 = vpack.c.b16 %v306, %v305
        %vm311 = vcmask 261120
        %v313 = vsel %vm311, %v294, 0
        %315 = vmatprep.subr.bf16.mxu0 0
        %316 = vmatpush1.bf16.msra.mxu0 %v307
        %317 = vmatprep.subr.bf16.mxu0 0
        %318 = vmatpush1.bf16.msra.mxu0 %v308
        %319 = vmatprep.subr.bf16.mxu0 0
        %320 = vmatpush1.bf16.msra.mxu0 0
        %321 = vmatprep.subr.bf16.mxu0 0
        %322 = vmatpush1.bf16.msra.mxu0 0
        %323 = vmatprep.subr.bf16.mxu0 0
        %324 = vmatpush1.bf16.msra.mxu0 0
        %325 = vmatprep.subr.bf16.mxu0 0
        %326 = vmatpush1.bf16.msra.mxu0 0
        %327 = vmatprep.subr.bf16.mxu0 0
        %328 = vmatpush1.bf16.msra.mxu0 0
        %329 = vmatprep.subr.bf16.mxu0 0
        %330 = vmatpush1.bf16.msra.mxu0 0
        %331 = vmatprep.subr.bf16.mxu0 0
        %332 = vmatpush1.bf16.msra.mxu0 0
        %333 = vmatprep.subr.bf16.mxu0 0
        %334 = vmatpush1.bf16.msra.mxu0 0
        %335 = vmatprep.subr.bf16.mxu0 0
        %336 = vmatpush1.bf16.msra.mxu0 0
        %337 = vmatprep.subr.bf16.mxu0 0
        %338 = vmatpush1.bf16.msra.mxu0 0
        %339 = vmatprep.subr.bf16.mxu0 0
        %340 = vmatpush1.bf16.msra.mxu0 0
        %341 = vmatprep.subr.bf16.mxu0 0
        %342 = vmatpush1.bf16.msra.mxu0 0
        %343 = vmatprep.subr.bf16.mxu0 0
        %344 = vmatpush1.bf16.msra.mxu0 0
        %345 = vmatprep.subr.bf16.mxu0 0
        %346 = vmatpush1.bf16.msra.mxu0 0
        %347 = vmatprep.mubr.bf16.mxu0 0
        %348 = vmatmul.mubr.bf16.gmra.mrb[0].mxu0 %v313
        %v349 = vpop.f32.mrb[0].mxu0
        %v350 = vadd.f32 0.0, %v349
        %v351 = vpop.f32.mrb[0].mxu0
        %v352 = vpop.f32.mrb[0].mxu0
        %v353 = vpop.f32.mrb[0].mxu0
        %354 = vdwg.mxu0
        %v355 = vadd.f32 %v293, %v350
        %vm356 = vcmask 785408
        %357 = vst.msk [vmem:[#allocation2] sm:$0xff] %vm356, %v355
        // Predicated region
        $region41: #{tpu_custom_call.1} parent=27 // pred_check
          %p358 = pneg %p287
        $region42: #{tpu_custom_call.1} parent=27 // pred_check_branch
          %360 = sbr.rel (%p358) target = $region44
        $region43: #{tpu_custom_call.1} parent=27 // pred_region
          %v361 = vld [vmem:[#allocation2] sm:$0xff]
          %v362 = vpack.c.bf16 %v361, %v361
          %vm363 = vcmask 60416
          %364 = vst.msk [vmem:[%s270] sm:$0xf] %vm363, %v362
          %v366 = vunpack.c.l.b16 %v362
          %v367 = vpack.c.b16 %v366, %v366
          %368 = vrot.lane.b32.xlu0 %v367, 96
          %v369 = vpop.permute.xlu0 %368
          %371 = vst.msk [vmem:[%s277] sm:$0xf] %vm363, %v369
          %372 = vrot.lane.b32.xlu0 %v367, 64
          %v373 = vpop.permute.xlu0 %372
          %375 = vst.msk [vmem:[%s284] sm:$0xf] %vm363, %v373
          %376 = vrot.lane.b32.xlu0 %v367, 120
          %v377 = vpop.permute.xlu0 %376
          %s379 = scalar_lea.vmem %s270, 4 [#allocation8]
          %380 = vst.msk [vmem:[%s379] sm:$0xf] %vm363, %v377
          %381 = vrot.lane.b32.xlu0 %v367, 88
          %v382 = vpop.permute.xlu0 %381
          %s384 = scalar_lea.vmem %s277, 4 [#allocation9]
          %385 = vst.msk [vmem:[%s384] sm:$0xf] %vm363, %v382
          %386 = vrot.lane.b32.xlu0 %v367, 56
          %v387 = vpop.permute.xlu0 %386
          %s389 = scalar_lea.vmem %s284, 4 [#allocation11]
          %390 = vst.msk [vmem:[%s389] sm:$0xf] %vm363, %v387
          %391 = vrot.lane.b32.xlu0 %v367, 112
          %v392 = vpop.permute.xlu0 %391
          %s394 = scalar_lea.vmem %s270, 8 [#allocation8]
          %395 = vst.msk [vmem:[%s394] sm:$0xf] %vm363, %v392
          %396 = vrot.lane.b32.xlu0 %v367, 80
          %v397 = vpop.permute.xlu0 %396
          %s399 = scalar_lea.vmem %s277, 8 [#allocation9]
          %400 = vst.msk [vmem:[%s399] sm:$0xf] %vm363, %v397
          %401 = vrot.lane.b32.xlu0 %v367, 48
          %v402 = vpop.permute.xlu0 %401
          %s404 = scalar_lea.vmem %s284, 8 [#allocation11]
          %405 = vst.msk [vmem:[%s404] sm:$0xf] %vm363, %v402
          %406 = vrot.lane.b32.xlu0 %v367, 104
          %v407 = vpop.permute.xlu0 %406
          %s409 = scalar_lea.vmem %s270, 12 [#allocation8]
          %410 = vst.msk [vmem:[%s409] sm:$0xf] %vm363, %v407
          %411 = vrot.lane.b32.xlu0 %v367, 72
          %v412 = vpop.permute.xlu0 %411
          %s414 = scalar_lea.vmem %s277, 12 [#allocation9]
          %415 = vst.msk [vmem:[%s414] sm:$0xf] %vm363, %v412
          %416 = vrot.lane.b32.xlu0 %v367, 40
          %v417 = vpop.permute.xlu0 %416
          %s419 = scalar_lea.vmem %s284, 12 [#allocation11]
          %420 = vst.msk [vmem:[%s419] sm:$0xf] %vm363, %v417
        $region44: #{tpu_custom_call.1} parent=27 // pred_fallthru
          _
        %s421 = sand.u32 %s111, 1
        %s422 = scalar_lea.sflag [#allocation5], %s421
        %s423 = sand.u32 %s111, 1
        %s424 = smul.addr %s423, 16
        %s425 = scalar_lea.vmem [#allocation8], %s424
        %s426 = sand.u32 %s26, 1
        %s427 = scalar_lea.sflag [#allocation10], %s426
        %s428 = sand.u32 %s139, 1
        %s429 = smul.addr %s428, 16
        %s430 = scalar_lea.vmem [#allocation9], %s429
        %s431 = sand.u32 %s26, 1
        %s432 = scalar_lea.sflag [#allocation10], %s431
        %s433 = sand.u32 %s167, 1
        %s434 = smul.addr %s433, 16
        %s435 = scalar_lea.vmem [#allocation11], %s434
        // Predicated region
        $region45: #{tpu_custom_call.1} parent=27 // pred_check
          %p436 = pneg %p121
        $region46: #{tpu_custom_call.1} parent=27 // pred_check_branch
          %438 = sbr.rel (%p436) target = $region48
        $region47: #{tpu_custom_call.1} parent=27 // pred_region
          %s440 = ssub.s32 256, 256
          %441 = vsyncadd %s422, %s440
          %s442 = smul.addr %s31, 4
          %s443 = sadd.s32 %s32, %s442
          %s444 = smul.addr %s443, 64
          %s445 = scalar_lea.hbm %s2, %s444
          %s446 = sshll.u32 %s425, 4
          %s447 = int_to_ptr.vmem [resolvable:$true] %s446
          %452 = dma.vmem_to_hbm [thread:$0]  %s447, 256, %s445, %s422, 64, 64, 4
        $region48: #{tpu_custom_call.1} parent=27 // pred_fallthru
          _
        // Predicated region
        $region49: #{tpu_custom_call.1} parent=27 // pred_check
          %p453 = pneg %p149
        $region50: #{tpu_custom_call.1} parent=27 // pred_check_branch
          %455 = sbr.rel (%p453) target = $region52
        $region51: #{tpu_custom_call.1} parent=27 // pred_region
          %s457 = ssub.s32 256, 256
          %458 = vsyncadd %s427, %s457
          %s459 = smul.addr %s31, 4
          %s460 = sadd.s32 %s32, %s459
          %s461 = smul.addr %s460, 64
          %s462 = scalar_lea.hbm %s3, %s461
          %s463 = sshll.u32 %s430, 4
          %s464 = int_to_ptr.vmem [resolvable:$true] %s463
          %469 = dma.vmem_to_hbm [thread:$0]  %s464, 256, %s462, %s427, 64, 64, 4
        $region52: #{tpu_custom_call.1} parent=27 // pred_fallthru
          _
        // Predicated region
        $region53: #{tpu_custom_call.1} parent=27 // pred_check
          %p470 = pneg %p177
        $region54: #{tpu_custom_call.1} parent=27 // pred_check_branch
          %472 = sbr.rel (%p470) target = $region56
        $region55: #{tpu_custom_call.1} parent=27 // pred_region
          %s474 = ssub.s32 256, 256
          %475 = vsyncadd %s432, %s474
          %s476 = smul.addr %s31, 4
          %s477 = sadd.s32 %s32, %s476
          %s478 = smul.addr %s477, 64
          %s479 = scalar_lea.hbm %s4, %s478
          %s480 = sshll.u32 %s435, 4
          %s481 = int_to_ptr.vmem [resolvable:$true] %s480
          %486 = dma.vmem_to_hbm [thread:$0]  %s481, 256, %s479, %s432, 64, 64, 4
        $region56: #{tpu_custom_call.1} parent=27 // pred_fallthru
          _
      $region28: #{tpu_custom_call.1} parent=5 // pred_fallthru
        _
      %p487 = scmp.le.s32.totalorder 2, %s21
      // Predicated region
      $region57: #{tpu_custom_call.1} parent=5 // pred_check
        %p488 = pneg %p487
      $region58: #{tpu_custom_call.1} parent=5 // pred_check_branch
        %490 = sbr.rel (%p488) target = $region60
      $region59: #{tpu_custom_call.1} parent=5 // pred_region
        %s491 = ssub.s32 %s21, 2
        // Predicated region
        $region61: #{tpu_custom_call.1} parent=59 // pred_check
          %p492 = pneg %p127
        $region62: #{tpu_custom_call.1} parent=59 // pred_check_branch
          %494 = sbr.rel (%p492) target = $region64
        $region63: #{tpu_custom_call.1} parent=59 // pred_region
          %s495 = sand.u32 %s112, 1
          %s496 = scalar_lea.sflag [#allocation5], %s495
          %s497 = sand.u32 %s112, 1
          %s498 = smul.addr %s497, 16
          %s499 = scalar_lea.vmem [#allocation8], %s498
          %500 = dma.done %s496, 256
        $region64: #{tpu_custom_call.1} parent=59 // pred_fallthru
          _
        // Predicated region
        $region65: #{tpu_custom_call.1} parent=59 // pred_check
          %p501 = pneg %p155
        $region66: #{tpu_custom_call.1} parent=59 // pred_check_branch
          %503 = sbr.rel (%p501) target = $region68
        $region67: #{tpu_custom_call.1} parent=59 // pred_region
          %s504 = sand.u32 %s27, 1
          %s505 = scalar_lea.sflag [#allocation10], %s504
          %s506 = sand.u32 %s140, 1
          %s507 = smul.addr %s506, 16
          %s508 = scalar_lea.vmem [#allocation9], %s507
          %509 = dma.done %s505, 256
        $region68: #{tpu_custom_call.1} parent=59 // pred_fallthru
          _
        // Predicated region
        $region69: #{tpu_custom_call.1} parent=59 // pred_check
          %p510 = pneg %p183
        $region70: #{tpu_custom_call.1} parent=59 // pred_check_branch
          %512 = sbr.rel (%p510) target = $region72
        $region71: #{tpu_custom_call.1} parent=59 // pred_region
          %s513 = sand.u32 %s27, 1
          %s514 = scalar_lea.sflag [#allocation10], %s513
          %s515 = sand.u32 %s168, 1
          %s516 = smul.addr %s515, 16
          %s517 = scalar_lea.vmem [#allocation11], %s516
          %518 = dma.done %s514, 256
        $region72: #{tpu_custom_call.1} parent=59 // pred_fallthru
          _
      $region60: #{tpu_custom_call.1} parent=5 // pred_fallthru
        _
    $region6: #{tpu_custom_call.1} parent=1 // loop_footer
      %s25 = sadd.s32 1, %s21
    $region7: #{tpu_custom_call.1} parent=1 // loop_footer_branch
      %20 = sbr.rel target = $region3
    $region8: #{tpu_custom_call.1} parent=1 // loop_exit
      _
    %519 = vsyncpa [#allocation4], 1
    %s520 = scalar_lea.sflag [#allocation4], 1
    %521 = vsyncpa %s520, 1
    %522 = vsyncpa [#allocation7], 1
    %523 = vsyncpa [#allocation5], 1
    %s524 = scalar_lea.sflag [#allocation5], 1
    %525 = vsyncpa %s524, 1
    %526 = vsyncpa [#allocation10], 1
    %s527 = scalar_lea.sflag [#allocation10], 1
    %528 = vsyncpa %s527, 1

</llo_original>
